<compile_context>
chip_gen: v7x
topology: tpu7x:2x2x1
jax: 0.10.0
libtpu: 0.0.40
codegen_flags: <defaults>
</compile_context>

<pallas_src>
import functools
import math

import jax
import jax.numpy as jnp
from jax import lax
from jax.experimental import pallas as pl
from jax.experimental.pallas import tpu as pltpu


# ----------------------------- Pallas kernel -------------------------------

def lstm_recurrence_kernel(gx_ref, whh_ref, out_ref, h_scr, c_scr,
                           *, steps, reverse):
    """Runs `steps` LSTM time steps of one direction on one time chunk.

    gx_ref  : (TC, B, 4H)  precomputed x_t @ W_ih^T + (b_ih + b_hh), f32
    whh_ref : (H, 4H)      W_hh^T (f32 or bf16)
    out_ref : (TC, B, H)   hidden states for this chunk
    h_scr   : (B, H) f32 VMEM  hidden state carried across grid steps
    c_scr   : (B, H) f32 VMEM  cell state carried across grid steps
    """
    chunk = pl.program_id(0)

    @pl.when(chunk == 0)
    def _():
        h_scr[...] = jnp.zeros_like(h_scr)
        c_scr[...] = jnp.zeros_like(c_scr)

    H = h_scr.shape[-1]
    whh = whh_ref[...]            # loaded once per chunk
    h = h_scr[...]                # (B, H) f32
    c = c_scr[...]                # (B, H) f32

    # Static unroll over the chunk (TC is a small compile-time constant).
    time_order = range(steps - 1, -1, -1) if reverse else range(steps)
    for t in time_order:
        gates = gx_ref[t] + jnp.dot(h.astype(whh.dtype), whh,
                                    preferred_element_type=jnp.float32)
        # PyTorch gate order [i, f, g, o]; element-wise math stays f32.
        i = jax.nn.sigmoid(gates[:, 0 * H:1 * H])
        f = jax.nn.sigmoid(gates[:, 1 * H:2 * H])
        g = jnp.tanh(gates[:, 2 * H:3 * H])
        o = jax.nn.sigmoid(gates[:, 3 * H:4 * H])
        c = f * c + i * g
        h = o * jnp.tanh(c)
        out_ref[t] = h.astype(out_ref.dtype)

    h_scr[...] = h
    c_scr[...] = c


def _pick_time_chunk(T, max_chunk=32):
    """Largest divisor of T that is <= max_chunk (amortizes per-step overhead)."""
    best = 1
    for cand in range(1, min(T, max_chunk) + 1):
        if T % cand == 0:
            best = cand
    return best


def lstm_single_direction(x_tm, w_ih, w_hh, b_ih, b_hh, *, reverse,
                          compute_dtype=jnp.float32):
    """One LSTM layer, one direction, over the full time-major sequence.

    x_tm : (T, B, D_in)   w_ih : (4H, D_in)   w_hh : (4H, H)   b_* : (4H,)
    """
    T, B, _ = x_tm.shape
    H = w_hh.shape[1]

    # Hoisted input projection: one big matmul over the whole sequence (f32 acc).
    gx = jnp.einsum(
        "tbd,gd->tbg",
        x_tm.astype(compute_dtype), w_ih.astype(compute_dtype),
        preferred_element_type=jnp.float32,
    ) + (b_ih + b_hh).astype(jnp.float32)            # (T, B, 4H) f32

    whh_t = jnp.transpose(w_hh).astype(compute_dtype)  # (H, 4H)

    tc = _pick_time_chunk(T)
    nc = T // tc
    if reverse:
        chunk_map = lambda cidx: (nc - 1 - cidx, 0, 0)
    else:
        chunk_map = lambda cidx: (cidx, 0, 0)

    kernel = functools.partial(lstm_recurrence_kernel, steps=tc, reverse=reverse)

    # Note: for very large H on v7x (64 MiB VMEM), single-buffer the constant
    # weight spec (pipeline_mode=pl.Buffered(1)) and raise vmem_limit_bytes.
    return pl.pallas_call(
        kernel,
        out_shape=jax.ShapeDtypeStruct((T, B, H), x_tm.dtype),
        grid=(nc,),
        in_specs=[
            pl.BlockSpec((tc, B, 4 * H), chunk_map),       # G_x chunk
            pl.BlockSpec((H, 4 * H), lambda cidx: (0, 0)),  # W_hh^T (constant)
        ],
        out_specs=pl.BlockSpec((tc, B, H), chunk_map),
        scratch_shapes=[
            pltpu.VMEM((B, H), jnp.float32),   # h state (f32 even in bf16 mode)
            pltpu.VMEM((B, H), jnp.float32),   # c state
        ],
        compiler_params=pltpu.CompilerParams(
            dimension_semantics=("arbitrary",),  # recurrent over time chunks
        ),
    )(gx, whh_t)


# ------------------------------ Module wrapper ------------------------------

def init_lstm_params(key, latent_dim, num_layers, hidden_dim, bidirectional):
    """Deterministic init matching nn.LSTM parameter shapes (uniform +-1/sqrt(H))."""
    num_dirs = 2 if bidirectional else 1
    k = 1.0 / math.sqrt(hidden_dim)
    params = {}
    for layer in range(num_layers):
        in_dim = latent_dim if layer == 0 else hidden_dim * num_dirs
        for d in range(num_dirs):
            key, k1, k2, k3, k4 = jax.random.split(key, 5)
            params[(layer, d)] = dict(
                w_ih=jax.random.uniform(k1, (4 * hidden_dim, in_dim),
                                        jnp.float32, -k, k),
                w_hh=jax.random.uniform(k2, (4 * hidden_dim, hidden_dim),
                                        jnp.float32, -k, k),
                b_ih=jax.random.uniform(k3, (4 * hidden_dim,),
                                        jnp.float32, -k, k),
                b_hh=jax.random.uniform(k4, (4 * hidden_dim,),
                                        jnp.float32, -k, k),
            )
    return params


def lstm_forward(x, params, num_layers, hidden_dim, bidirectional,
                 compute_dtype=jnp.float32):
    """Equivalent of LSTM.forward(x) with hidden_state=None.

    x : (B, T, latent_dim)  ->  (B, T, hidden_dim * num_directions)
    """
    num_dirs = 2 if bidirectional else 1
    inp = jnp.transpose(x, (1, 0, 2))  # time-major (T, B, D)
    for layer in range(num_layers):
        outs = []
        for d in range(num_dirs):
            p = params[(layer, d)]
            outs.append(lstm_single_direction(
                inp, p["w_ih"], p["w_hh"], p["b_ih"], p["b_hh"],
                reverse=(d == 1), compute_dtype=compute_dtype))
        inp = jnp.concatenate(outs, axis=-1) if num_dirs > 1 else outs[0]
    return jnp.transpose(inp, (1, 0, 2))  # back to (B, T, H*num_dirs)


# ----------------------------- Pure-JAX reference ---------------------------

def _ref_direction(x_tm, w_ih, w_hh, b_ih, b_hh, reverse):
    T, B, _ = x_tm.shape
    H = w_hh.shape[1]
    xs = x_tm[::-1] if reverse else x_tm

    def step(carry, x_t):
        h, c = carry
        gates = x_t @ w_ih.T + h @ w_hh.T + b_ih + b_hh
        i, f, g, o = jnp.split(gates, 4, axis=-1)
        i, f, o = jax.nn.sigmoid(i), jax.nn.sigmoid(f), jax.nn.sigmoid(o)
        g = jnp.tanh(g)
        c = f * c + i * g
        h = o * jnp.tanh(c)
        return (h, c), h

    init = (jnp.zeros((B, H), jnp.float32), jnp.zeros((B, H), jnp.float32))
    _, hs = lax.scan(step, init, xs)
    return hs[::-1] if reverse else hs


def lstm_reference(x, params, num_layers, hidden_dim, bidirectional):
    num_dirs = 2 if bidirectional else 1
    inp = jnp.transpose(x, (1, 0, 2))
    for layer in range(num_layers):
        outs = []
        for d in range(num_dirs):
            p = params[(layer, d)]
            outs.append(_ref_direction(inp, p["w_ih"], p["w_hh"],
                                       p["b_ih"], p["b_hh"], reverse=(d == 1)))
        inp = jnp.concatenate(outs, axis=-1) if num_dirs > 1 else outs[0]
    return jnp.transpose(inp, (1, 0, 2))


# ---------------------------------- Main ------------------------------------

if __name__ == "__main__":
    # Module config: LSTM(latent_dim, num_layers, hidden_dim, bidirectional)
    latent_dim = 32
    num_layers = 2
    hidden_dim = 32
    bidirectional = True

    B, T = 2, 8  # batch, sequence length (batch_first=True)

    key = jax.random.PRNGKey(0)
    key, xkey = jax.random.split(key)
    x = jax.random.normal(xkey, (B, T, latent_dim), jnp.float32)

    params = init_lstm_params(key, latent_dim, num_layers, hidden_dim,
                              bidirectional)
    num_dirs = 2 if bidirectional else 1

    ref = jax.block_until_ready(
        lstm_reference(x, params, num_layers, hidden_dim, bidirectional))

    # Full-precision path: must match the pure-JAX reference tightly.
    out_f32 = jax.block_until_ready(
        lstm_forward(x, params, num_layers, hidden_dim, bidirectional,
                     compute_dtype=jnp.float32))
    assert out_f32.shape == (B, T, hidden_dim * num_dirs), out_f32.shape
    err_f32 = float(jnp.max(jnp.abs(out_f32 - ref)))
    assert err_f32 < 1e-4, err_f32

    # bf16-matmul path (v6e/v7x MXU peak; state + gate math stay f32):
    # loose sanity bound against the f32 reference.
    out_bf16 = jax.block_until_ready(
        lstm_forward(x, params, num_layers, hidden_dim, bidirectional,
                     compute_dtype=jnp.bfloat16))
    err_bf16 = float(jnp.max(jnp.abs(out_bf16 - ref)))
    assert err_bf16 < 1e-1, err_bf16

    print("KERNEL_OK")
</pallas_src>

<mosaic_0001>
module attributes {stable_mosaic.version = 11 : i64} {
  func.func @lstm_recurrence_kernel(%arg0: i32, %arg1: memref<8x2x128xf32, #tpu.memory_space<vmem>>, %arg2: memref<32x128xf32, #tpu.memory_space<vmem>>, %arg3: memref<8x2x32xf32, #tpu.memory_space<vmem>>, %arg4: memref<2x32xf32, #tpu.memory_space<vmem>>, %arg5: memref<2x32xf32, #tpu.memory_space<vmem>>) attributes {dimension_semantics = [#tpu.dimension_semantics<arbitrary>], iteration_bounds = array<i64: 1>, scalar_prefetch = 0 : i64, scratch_operands = 2 : i64, tpu.core_type = #tpu.core_type<tc>, window_params = [{transform_indices = @transform_0, window_bounds = array<i64: 8, 2, 128>}, {pipeline_mode = #tpu.pipeline_mode<synchronous>, transform_indices = @transform_1, window_bounds = array<i64: 32, 128>}, {transform_indices = @transform_2, window_bounds = array<i64: 8, 2, 32>}]} {
    %c0_i32 = arith.constant 0 : i32
    %0 = arith.cmpi eq, %arg0, %c0_i32 : i32
    %1 = arith.extui %0 : i1 to i32
    %c0_i32_0 = arith.constant 0 : i32
    %2 = arith.cmpi ne, %1, %c0_i32_0 : i32
    scf.if %2 {
      %cst_82 = arith.constant 0.000000e+00 : f32
      %264 = vector.broadcast %cst_82 : f32 to vector<2x32xf32>
      %c0_83 = arith.constant 0 : index
      %c0_84 = arith.constant 0 : index
      %265 = vector.load %arg4[%c0_83, %c0_84] : memref<2x32xf32, #tpu.memory_space<vmem>>, vector<2x32xf32>
      tpu.vector_store %arg4[%c0_83, %c0_84], %264 {strides = array<i32>} : memref<2x32xf32, #tpu.memory_space<vmem>>, vector<2x32xf32>,
      %cst_85 = arith.constant 0.000000e+00 : f32
      %266 = vector.broadcast %cst_85 : f32 to vector<2x32xf32>
      %c0_86 = arith.constant 0 : index
      %c0_87 = arith.constant 0 : index
      %267 = vector.load %arg5[%c0_86, %c0_87] : memref<2x32xf32, #tpu.memory_space<vmem>>, vector<2x32xf32>
      tpu.vector_store %arg5[%c0_86, %c0_87], %266 {strides = array<i32>} : memref<2x32xf32, #tpu.memory_space<vmem>>, vector<2x32xf32>,
    } else {
    }
    %c0 = arith.constant 0 : index
    %c0_1 = arith.constant 0 : index
    %3 = vector.load %arg2[%c0, %c0_1] : memref<32x128xf32, #tpu.memory_space<vmem>>, vector<32x128xf32>
    %c0_2 = arith.constant 0 : index
    %c0_3 = arith.constant 0 : index
    %4 = vector.load %arg4[%c0_2, %c0_3] : memref<2x32xf32, #tpu.memory_space<vmem>>, vector<2x32xf32>
    %c0_4 = arith.constant 0 : index
    %c0_5 = arith.constant 0 : index
    %5 = vector.load %arg5[%c0_4, %c0_5] : memref<2x32xf32, #tpu.memory_space<vmem>>, vector<2x32xf32>
    %c0_6 = arith.constant 0 : index
    %c0_7 = arith.constant 0 : index
    %c0_8 = arith.constant 0 : index
    %6 = vector.load %arg1[%c0_6, %c0_7, %c0_8] : memref<8x2x128xf32, #tpu.memory_space<vmem>>, vector<1x2x128xf32>
    %7 = vector.shape_cast %6 : vector<1x2x128xf32> to vector<2x128xf32>
    %cst = arith.constant dense<0.000000e+00> : vector<2x128xf32>
    %8 = tpu.matmul %4, %3, %cst {dimension_numbers = #tpu.dot_dimension_numbers<[1], [0], [0], [1], [0, 0, 1, 1], [], []>} : vector<2x32xf32>, vector<32x128xf32>, vector<2x128xf32> -> vector<2x128xf32>
    %9 = arith.addf %7, %8 : vector<2x128xf32>
    %10 = vector.extract_strided_slice %9 {offsets = [0, 0], sizes = [2, 32], strides = [1, 1]} : vector<2x128xf32> to vector<2x32xf32>
    %11 = arith.negf %10 : vector<2x32xf32>
    %12 = math.exp %11 : vector<2x32xf32>
    %cst_9 = arith.constant 1.000000e+00 : f32
    %13 = vector.broadcast %cst_9 : f32 to vector<2x32xf32>
    %14 = arith.addf %13, %12 : vector<2x32xf32>
    %15 = arith.divf %13, %14 : vector<2x32xf32>
    %16 = vector.extract_strided_slice %9 {offsets = [0, 32], sizes = [2, 32], strides = [1, 1]} : vector<2x128xf32> to vector<2x32xf32>
    %17 = arith.negf %16 : vector<2x32xf32>
    %18 = math.exp %17 : vector<2x32xf32>
    %cst_10 = arith.constant 1.000000e+00 : f32
    %19 = vector.broadcast %cst_10 : f32 to vector<2x32xf32>
    %20 = arith.addf %19, %18 : vector<2x32xf32>
    %21 = arith.divf %19, %20 : vector<2x32xf32>
    %22 = vector.extract_strided_slice %9 {offsets = [0, 64], sizes = [2, 32], strides = [1, 1]} : vector<2x128xf32> to vector<2x32xf32>
    %23 = math.tanh %22 : vector<2x32xf32>
    %24 = vector.extract_strided_slice %9 {offsets = [0, 96], sizes = [2, 32], strides = [1, 1]} : vector<2x128xf32> to vector<2x32xf32>
    %25 = arith.negf %24 : vector<2x32xf32>
    %26 = math.exp %25 : vector<2x32xf32>
    %cst_11 = arith.constant 1.000000e+00 : f32
    %27 = vector.broadcast %cst_11 : f32 to vector<2x32xf32>
    %28 = arith.addf %27, %26 : vector<2x32xf32>
    %29 = arith.divf %27, %28 : vector<2x32xf32>
    %30 = arith.mulf %21, %5 : vector<2x32xf32>
    %31 = arith.mulf %15, %23 : vector<2x32xf32>
    %32 = arith.addf %30, %31 : vector<2x32xf32>
    %33 = math.tanh %32 : vector<2x32xf32>
    %34 = arith.mulf %29, %33 : vector<2x32xf32>
    %c0_12 = arith.constant 0 : index
    %c0_13 = arith.constant 0 : index
    %c0_14 = arith.constant 0 : index
    %35 = vector.load %arg3[%c0_12, %c0_13, %c0_14] : memref<8x2x32xf32, #tpu.memory_space<vmem>>, vector<1x2x32xf32>
    %36 = vector.shape_cast %35 : vector<1x2x32xf32> to vector<2x32xf32>
    %37 = vector.shape_cast %34 : vector<2x32xf32> to vector<1x2x32xf32>
    tpu.vector_store %arg3[%c0_12, %c0_13, %c0_14], %37 {strides = array<i32>} : memref<8x2x32xf32, #tpu.memory_space<vmem>>, vector<1x2x32xf32>,
    %c1 = arith.constant 1 : index
    %c0_15 = arith.constant 0 : index
    %c0_16 = arith.constant 0 : index
    %38 = vector.load %arg1[%c1, %c0_15, %c0_16] : memref<8x2x128xf32, #tpu.memory_space<vmem>>, vector<1x2x128xf32>
    %39 = vector.shape_cast %38 : vector<1x2x128xf32> to vector<2x128xf32>
    %cst_17 = arith.constant dense<0.000000e+00> : vector<2x128xf32>
    %40 = tpu.matmul %34, %3, %cst_17 {dimension_numbers = #tpu.dot_dimension_numbers<[1], [0], [0], [1], [0, 0, 1, 1], [], []>} : vector<2x32xf32>, vector<32x128xf32>, vector<2x128xf32> -> vector<2x128xf32>
    %41 = arith.addf %39, %40 : vector<2x128xf32>
    %42 = vector.extract_strided_slice %41 {offsets = [0, 0], sizes = [2, 32], strides = [1, 1]} : vector<2x128xf32> to vector<2x32xf32>
    %43 = arith.negf %42 : vector<2x32xf32>
    %44 = math.exp %43 : vector<2x32xf32>
    %cst_18 = arith.constant 1.000000e+00 : f32
    %45 = vector.broadcast %cst_18 : f32 to vector<2x32xf32>
    %46 = arith.addf %45, %44 : vector<2x32xf32>
    %47 = arith.divf %45, %46 : vector<2x32xf32>
    %48 = vector.extract_strided_slice %41 {offsets = [0, 32], sizes = [2, 32], strides = [1, 1]} : vector<2x128xf32> to vector<2x32xf32>
    %49 = arith.negf %48 : vector<2x32xf32>
    %50 = math.exp %49 : vector<2x32xf32>
    %cst_19 = arith.constant 1.000000e+00 : f32
    %51 = vector.broadcast %cst_19 : f32 to vector<2x32xf32>
    %52 = arith.addf %51, %50 : vector<2x32xf32>
    %53 = arith.divf %51, %52 : vector<2x32xf32>
    %54 = vector.extract_strided_slice %41 {offsets = [0, 64], sizes = [2, 32], strides = [1, 1]} : vector<2x128xf32> to vector<2x32xf32>
    %55 = math.tanh %54 : vector<2x32xf32>
    %56 = vector.extract_strided_slice %41 {offsets = [0, 96], sizes = [2, 32], strides = [1, 1]} : vector<2x128xf32> to vector<2x32xf32>
    %57 = arith.negf %56 : vector<2x32xf32>
    %58 = math.exp %57 : vector<2x32xf32>
    %cst_20 = arith.constant 1.000000e+00 : f32
    %59 = vector.broadcast %cst_20 : f32 to vector<2x32xf32>
    %60 = arith.addf %59, %58 : vector<2x32xf32>
    %61 = arith.divf %59, %60 : vector<2x32xf32>
    %62 = arith.mulf %53, %32 : vector<2x32xf32>
    %63 = arith.mulf %47, %55 : vector<2x32xf32>
    %64 = arith.addf %62, %63 : vector<2x32xf32>
    %65 = math.tanh %64 : vector<2x32xf32>
    %66 = arith.mulf %61, %65 : vector<2x32xf32>
    %c1_21 = arith.constant 1 : index
    %c0_22 = arith.constant 0 : index
    %c0_23 = arith.constant 0 : index
    %67 = vector.load %arg3[%c1_21, %c0_22, %c0_23] : memref<8x2x32xf32, #tpu.memory_space<vmem>>, vector<1x2x32xf32>
    %68 = vector.shape_cast %67 : vector<1x2x32xf32> to vector<2x32xf32>
    %69 = vector.shape_cast %66 : vector<2x32xf32> to vector<1x2x32xf32>
    tpu.vector_store %arg3[%c1_21, %c0_22, %c0_23], %69 {strides = array<i32>} : memref<8x2x32xf32, #tpu.memory_space<vmem>>, vector<1x2x32xf32>,
    %c2 = arith.constant 2 : index
    %c0_24 = arith.constant 0 : index
    %c0_25 = arith.constant 0 : index
    %70 = vector.load %arg1[%c2, %c0_24, %c0_25] : memref<8x2x128xf32, #tpu.memory_space<vmem>>, vector<1x2x128xf32>
    %71 = vector.shape_cast %70 : vector<1x2x128xf32> to vector<2x128xf32>
    %cst_26 = arith.constant dense<0.000000e+00> : vector<2x128xf32>
    %72 = tpu.matmul %66, %3, %cst_26 {dimension_numbers = #tpu.dot_dimension_numbers<[1], [0], [0], [1], [0, 0, 1, 1], [], []>} : vector<2x32xf32>, vector<32x128xf32>, vector<2x128xf32> -> vector<2x128xf32>
    %73 = arith.addf %71, %72 : vector<2x128xf32>
    %74 = vector.extract_strided_slice %73 {offsets = [0, 0], sizes = [2, 32], strides = [1, 1]} : vector<2x128xf32> to vector<2x32xf32>
    %75 = arith.negf %74 : vector<2x32xf32>
    %76 = math.exp %75 : vector<2x32xf32>
    %cst_27 = arith.constant 1.000000e+00 : f32
    %77 = vector.broadcast %cst_27 : f32 to vector<2x32xf32>
    %78 = arith.addf %77, %76 : vector<2x32xf32>
    %79 = arith.divf %77, %78 : vector<2x32xf32>
    %80 = vector.extract_strided_slice %73 {offsets = [0, 32], sizes = [2, 32], strides = [1, 1]} : vector<2x128xf32> to vector<2x32xf32>
    %81 = arith.negf %80 : vector<2x32xf32>
    %82 = math.exp %81 : vector<2x32xf32>
    %cst_28 = arith.constant 1.000000e+00 : f32
    %83 = vector.broadcast %cst_28 : f32 to vector<2x32xf32>
    %84 = arith.addf %83, %82 : vector<2x32xf32>
    %85 = arith.divf %83, %84 : vector<2x32xf32>
    %86 = vector.extract_strided_slice %73 {offsets = [0, 64], sizes = [2, 32], strides = [1, 1]} : vector<2x128xf32> to vector<2x32xf32>
    %87 = math.tanh %86 : vector<2x32xf32>
    %88 = vector.extract_strided_slice %73 {offsets = [0, 96], sizes = [2, 32], strides = [1, 1]} : vector<2x128xf32> to vector<2x32xf32>
    %89 = arith.negf %88 : vector<2x32xf32>
    %90 = math.exp %89 : vector<2x32xf32>
    %cst_29 = arith.constant 1.000000e+00 : f32
    %91 = vector.broadcast %cst_29 : f32 to vector<2x32xf32>
    %92 = arith.addf %91, %90 : vector<2x32xf32>
    %93 = arith.divf %91, %92 : vector<2x32xf32>
    %94 = arith.mulf %85, %64 : vector<2x32xf32>
    %95 = arith.mulf %79, %87 : vector<2x32xf32>
    %96 = arith.addf %94, %95 : vector<2x32xf32>
    %97 = math.tanh %96 : vector<2x32xf32>
    %98 = arith.mulf %93, %97 : vector<2x32xf32>
    %c2_30 = arith.constant 2 : index
    %c0_31 = arith.constant 0 : index
    %c0_32 = arith.constant 0 : index
    %99 = vector.load %arg3[%c2_30, %c0_31, %c0_32] : memref<8x2x32xf32, #tpu.memory_space<vmem>>, vector<1x2x32xf32>
    %100 = vector.shape_cast %99 : vector<1x2x32xf32> to vector<2x32xf32>
    %101 = vector.shape_cast %98 : vector<2x32xf32> to vector<1x2x32xf32>
    tpu.vector_store %arg3[%c2_30, %c0_31, %c0_32], %101 {strides = array<i32>} : memref<8x2x32xf32, #tpu.memory_space<vmem>>, vector<1x2x32xf32>,
    %c3 = arith.constant 3 : index
    %c0_33 = arith.constant 0 : index
    %c0_34 = arith.constant 0 : index
    %102 = vector.load %arg1[%c3, %c0_33, %c0_34] : memref<8x2x128xf32, #tpu.memory_space<vmem>>, vector<1x2x128xf32>
    %103 = vector.shape_cast %102 : vector<1x2x128xf32> to vector<2x128xf32>
    %cst_35 = arith.constant dense<0.000000e+00> : vector<2x128xf32>
    %104 = tpu.matmul %98, %3, %cst_35 {dimension_numbers = #tpu.dot_dimension_numbers<[1], [0], [0], [1], [0, 0, 1, 1], [], []>} : vector<2x32xf32>, vector<32x128xf32>, vector<2x128xf32> -> vector<2x128xf32>
    %105 = arith.addf %103, %104 : vector<2x128xf32>
    %106 = vector.extract_strided_slice %105 {offsets = [0, 0], sizes = [2, 32], strides = [1, 1]} : vector<2x128xf32> to vector<2x32xf32>
    %107 = arith.negf %106 : vector<2x32xf32>
    %108 = math.exp %107 : vector<2x32xf32>
    %cst_36 = arith.constant 1.000000e+00 : f32
    %109 = vector.broadcast %cst_36 : f32 to vector<2x32xf32>
    %110 = arith.addf %109, %108 : vector<2x32xf32>
    %111 = arith.divf %109, %110 : vector<2x32xf32>
    %112 = vector.extract_strided_slice %105 {offsets = [0, 32], sizes = [2, 32], strides = [1, 1]} : vector<2x128xf32> to vector<2x32xf32>
    %113 = arith.negf %112 : vector<2x32xf32>
    %114 = math.exp %113 : vector<2x32xf32>
    %cst_37 = arith.constant 1.000000e+00 : f32
    %115 = vector.broadcast %cst_37 : f32 to vector<2x32xf32>
    %116 = arith.addf %115, %114 : vector<2x32xf32>
    %117 = arith.divf %115, %116 : vector<2x32xf32>
    %118 = vector.extract_strided_slice %105 {offsets = [0, 64], sizes = [2, 32], strides = [1, 1]} : vector<2x128xf32> to vector<2x32xf32>
    %119 = math.tanh %118 : vector<2x32xf32>
    %120 = vector.extract_strided_slice %105 {offsets = [0, 96], sizes = [2, 32], strides = [1, 1]} : vector<2x128xf32> to vector<2x32xf32>
    %121 = arith.negf %120 : vector<2x32xf32>
    %122 = math.exp %121 : vector<2x32xf32>
    %cst_38 = arith.constant 1.000000e+00 : f32
    %123 = vector.broadcast %cst_38 : f32 to vector<2x32xf32>
    %124 = arith.addf %123, %122 : vector<2x32xf32>
    %125 = arith.divf %123, %124 : vector<2x32xf32>
    %126 = arith.mulf %117, %96 : vector<2x32xf32>
    %127 = arith.mulf %111, %119 : vector<2x32xf32>
    %128 = arith.addf %126, %127 : vector<2x32xf32>
    %129 = math.tanh %128 : vector<2x32xf32>
    %130 = arith.mulf %125, %129 : vector<2x32xf32>
    %c3_39 = arith.constant 3 : index
    %c0_40 = arith.constant 0 : index
    %c0_41 = arith.constant 0 : index
    %131 = vector.load %arg3[%c3_39, %c0_40, %c0_41] : memref<8x2x32xf32, #tpu.memory_space<vmem>>, vector<1x2x32xf32>
    %132 = vector.shape_cast %131 : vector<1x2x32xf32> to vector<2x32xf32>
    %133 = vector.shape_cast %130 : vector<2x32xf32> to vector<1x2x32xf32>
    tpu.vector_store %arg3[%c3_39, %c0_40, %c0_41], %133 {strides = array<i32>} : memref<8x2x32xf32, #tpu.memory_space<vmem>>, vector<1x2x32xf32>,
    %c4 = arith.constant 4 : index
    %c0_42 = arith.constant 0 : index
    %c0_43 = arith.constant 0 : index
    %134 = vector.load %arg1[%c4, %c0_42, %c0_43] : memref<8x2x128xf32, #tpu.memory_space<vmem>>, vector<1x2x128xf32>
    %135 = vector.shape_cast %134 : vector<1x2x128xf32> to vector<2x128xf32>
    %cst_44 = arith.constant dense<0.000000e+00> : vector<2x128xf32>
    %136 = tpu.matmul %130, %3, %cst_44 {dimension_numbers = #tpu.dot_dimension_numbers<[1], [0], [0], [1], [0, 0, 1, 1], [], []>} : vector<2x32xf32>, vector<32x128xf32>, vector<2x128xf32> -> vector<2x128xf32>
    %137 = arith.addf %135, %136 : vector<2x128xf32>
    %138 = vector.extract_strided_slice %137 {offsets = [0, 0], sizes = [2, 32], strides = [1, 1]} : vector<2x128xf32> to vector<2x32xf32>
    %139 = arith.negf %138 : vector<2x32xf32>
    %140 = math.exp %139 : vector<2x32xf32>
    %cst_45 = arith.constant 1.000000e+00 : f32
    %141 = vector.broadcast %cst_45 : f32 to vector<2x32xf32>
    %142 = arith.addf %141, %140 : vector<2x32xf32>
    %143 = arith.divf %141, %142 : vector<2x32xf32>
    %144 = vector.extract_strided_slice %137 {offsets = [0, 32], sizes = [2, 32], strides = [1, 1]} : vector<2x128xf32> to vector<2x32xf32>
    %145 = arith.negf %144 : vector<2x32xf32>
    %146 = math.exp %145 : vector<2x32xf32>
    %cst_46 = arith.constant 1.000000e+00 : f32
    %147 = vector.broadcast %cst_46 : f32 to vector<2x32xf32>
    %148 = arith.addf %147, %146 : vector<2x32xf32>
    %149 = arith.divf %147, %148 : vector<2x32xf32>
    %150 = vector.extract_strided_slice %137 {offsets = [0, 64], sizes = [2, 32], strides = [1, 1]} : vector<2x128xf32> to vector<2x32xf32>
    %151 = math.tanh %150 : vector<2x32xf32>
    %152 = vector.extract_strided_slice %137 {offsets = [0, 96], sizes = [2, 32], strides = [1, 1]} : vector<2x128xf32> to vector<2x32xf32>
    %153 = arith.negf %152 : vector<2x32xf32>
    %154 = math.exp %153 : vector<2x32xf32>
    %cst_47 = arith.constant 1.000000e+00 : f32
    %155 = vector.broadcast %cst_47 : f32 to vector<2x32xf32>
    %156 = arith.addf %155, %154 : vector<2x32xf32>
    %157 = arith.divf %155, %156 : vector<2x32xf32>
    %158 = arith.mulf %149, %128 : vector<2x32xf32>
    %159 = arith.mulf %143, %151 : vector<2x32xf32>
    %160 = arith.addf %158, %159 : vector<2x32xf32>
    %161 = math.tanh %160 : vector<2x32xf32>
    %162 = arith.mulf %157, %161 : vector<2x32xf32>
    %c4_48 = arith.constant 4 : index
    %c0_49 = arith.constant 0 : index
    %c0_50 = arith.constant 0 : index
    %163 = vector.load %arg3[%c4_48, %c0_49, %c0_50] : memref<8x2x32xf32, #tpu.memory_space<vmem>>, vector<1x2x32xf32>
    %164 = vector.shape_cast %163 : vector<1x2x32xf32> to vector<2x32xf32>
    %165 = vector.shape_cast %162 : vector<2x32xf32> to vector<1x2x32xf32>
    tpu.vector_store %arg3[%c4_48, %c0_49, %c0_50], %165 {strides = array<i32>} : memref<8x2x32xf32, #tpu.memory_space<vmem>>, vector<1x2x32xf32>,
    %c5 = arith.constant 5 : index
    %c0_51 = arith.constant 0 : index
    %c0_52 = arith.constant 0 : index
    %166 = vector.load %arg1[%c5, %c0_51, %c0_52] : memref<8x2x128xf32, #tpu.memory_space<vmem>>, vector<1x2x128xf32>
    %167 = vector.shape_cast %166 : vector<1x2x128xf32> to vector<2x128xf32>
    %cst_53 = arith.constant dense<0.000000e+00> : vector<2x128xf32>
    %168 = tpu.matmul %162, %3, %cst_53 {dimension_numbers = #tpu.dot_dimension_numbers<[1], [0], [0], [1], [0, 0, 1, 1], [], []>} : vector<2x32xf32>, vector<32x128xf32>, vector<2x128xf32> -> vector<2x128xf32>
    %169 = arith.addf %167, %168 : vector<2x128xf32>
    %170 = vector.extract_strided_slice %169 {offsets = [0, 0], sizes = [2, 32], strides = [1, 1]} : vector<2x128xf32> to vector<2x32xf32>
    %171 = arith.negf %170 : vector<2x32xf32>
    %172 = math.exp %171 : vector<2x32xf32>
    %cst_54 = arith.constant 1.000000e+00 : f32
    %173 = vector.broadcast %cst_54 : f32 to vector<2x32xf32>
    %174 = arith.addf %173, %172 : vector<2x32xf32>
    %175 = arith.divf %173, %174 : vector<2x32xf32>
    %176 = vector.extract_strided_slice %169 {offsets = [0, 32], sizes = [2, 32], strides = [1, 1]} : vector<2x128xf32> to vector<2x32xf32>
    %177 = arith.negf %176 : vector<2x32xf32>
    %178 = math.exp %177 : vector<2x32xf32>
    %cst_55 = arith.constant 1.000000e+00 : f32
    %179 = vector.broadcast %cst_55 : f32 to vector<2x32xf32>
    %180 = arith.addf %179, %178 : vector<2x32xf32>
    %181 = arith.divf %179, %180 : vector<2x32xf32>
    %182 = vector.extract_strided_slice %169 {offsets = [0, 64], sizes = [2, 32], strides = [1, 1]} : vector<2x128xf32> to vector<2x32xf32>
    %183 = math.tanh %182 : vector<2x32xf32>
    %184 = vector.extract_strided_slice %169 {offsets = [0, 96], sizes = [2, 32], strides = [1, 1]} : vector<2x128xf32> to vector<2x32xf32>
    %185 = arith.negf %184 : vector<2x32xf32>
    %186 = math.exp %185 : vector<2x32xf32>
    %cst_56 = arith.constant 1.000000e+00 : f32
    %187 = vector.broadcast %cst_56 : f32 to vector<2x32xf32>
    %188 = arith.addf %187, %186 : vector<2x32xf32>
    %189 = arith.divf %187, %188 : vector<2x32xf32>
    %190 = arith.mulf %181, %160 : vector<2x32xf32>
    %191 = arith.mulf %175, %183 : vector<2x32xf32>
    %192 = arith.addf %190, %191 : vector<2x32xf32>
    %193 = math.tanh %192 : vector<2x32xf32>
    %194 = arith.mulf %189, %193 : vector<2x32xf32>
    %c5_57 = arith.constant 5 : index
    %c0_58 = arith.constant 0 : index
    %c0_59 = arith.constant 0 : index
    %195 = vector.load %arg3[%c5_57, %c0_58, %c0_59] : memref<8x2x32xf32, #tpu.memory_space<vmem>>, vector<1x2x32xf32>
    %196 = vector.shape_cast %195 : vector<1x2x32xf32> to vector<2x32xf32>
    %197 = vector.shape_cast %194 : vector<2x32xf32> to vector<1x2x32xf32>
    tpu.vector_store %arg3[%c5_57, %c0_58, %c0_59], %197 {strides = array<i32>} : memref<8x2x32xf32, #tpu.memory_space<vmem>>, vector<1x2x32xf32>,
    %c6 = arith.constant 6 : index
    %c0_60 = arith.constant 0 : index
    %c0_61 = arith.constant 0 : index
    %198 = vector.load %arg1[%c6, %c0_60, %c0_61] : memref<8x2x128xf32, #tpu.memory_space<vmem>>, vector<1x2x128xf32>
    %199 = vector.shape_cast %198 : vector<1x2x128xf32> to vector<2x128xf32>
    %cst_62 = arith.constant dense<0.000000e+00> : vector<2x128xf32>
    %200 = tpu.matmul %194, %3, %cst_62 {dimension_numbers = #tpu.dot_dimension_numbers<[1], [0], [0], [1], [0, 0, 1, 1], [], []>} : vector<2x32xf32>, vector<32x128xf32>, vector<2x128xf32> -> vector<2x128xf32>
    %201 = arith.addf %199, %200 : vector<2x128xf32>
    %202 = vector.extract_strided_slice %201 {offsets = [0, 0], sizes = [2, 32], strides = [1, 1]} : vector<2x128xf32> to vector<2x32xf32>
    %203 = arith.negf %202 : vector<2x32xf32>
    %204 = math.exp %203 : vector<2x32xf32>
    %cst_63 = arith.constant 1.000000e+00 : f32
    %205 = vector.broadcast %cst_63 : f32 to vector<2x32xf32>
    %206 = arith.addf %205, %204 : vector<2x32xf32>
    %207 = arith.divf %205, %206 : vector<2x32xf32>
    %208 = vector.extract_strided_slice %201 {offsets = [0, 32], sizes = [2, 32], strides = [1, 1]} : vector<2x128xf32> to vector<2x32xf32>
    %209 = arith.negf %208 : vector<2x32xf32>
    %210 = math.exp %209 : vector<2x32xf32>
    %cst_64 = arith.constant 1.000000e+00 : f32
    %211 = vector.broadcast %cst_64 : f32 to vector<2x32xf32>
    %212 = arith.addf %211, %210 : vector<2x32xf32>
    %213 = arith.divf %211, %212 : vector<2x32xf32>
    %214 = vector.extract_strided_slice %201 {offsets = [0, 64], sizes = [2, 32], strides = [1, 1]} : vector<2x128xf32> to vector<2x32xf32>
    %215 = math.tanh %214 : vector<2x32xf32>
    %216 = vector.extract_strided_slice %201 {offsets = [0, 96], sizes = [2, 32], strides = [1, 1]} : vector<2x128xf32> to vector<2x32xf32>
    %217 = arith.negf %216 : vector<2x32xf32>
    %218 = math.exp %217 : vector<2x32xf32>
    %cst_65 = arith.constant 1.000000e+00 : f32
    %219 = vector.broadcast %cst_65 : f32 to vector<2x32xf32>
    %220 = arith.addf %219, %218 : vector<2x32xf32>
    %221 = arith.divf %219, %220 : vector<2x32xf32>
    %222 = arith.mulf %213, %192 : vector<2x32xf32>
    %223 = arith.mulf %207, %215 : vector<2x32xf32>
    %224 = arith.addf %222, %223 : vector<2x32xf32>
    %225 = math.tanh %224 : vector<2x32xf32>
    %226 = arith.mulf %221, %225 : vector<2x32xf32>
    %c6_66 = arith.constant 6 : index
    %c0_67 = arith.constant 0 : index
    %c0_68 = arith.constant 0 : index
    %227 = vector.load %arg3[%c6_66, %c0_67, %c0_68] : memref<8x2x32xf32, #tpu.memory_space<vmem>>, vector<1x2x32xf32>
    %228 = vector.shape_cast %227 : vector<1x2x32xf32> to vector<2x32xf32>
    %229 = vector.shape_cast %226 : vector<2x32xf32> to vector<1x2x32xf32>
    tpu.vector_store %arg3[%c6_66, %c0_67, %c0_68], %229 {strides = array<i32>} : memref<8x2x32xf32, #tpu.memory_space<vmem>>, vector<1x2x32xf32>,
    %c7 = arith.constant 7 : index
    %c0_69 = arith.constant 0 : index
    %c0_70 = arith.constant 0 : index
    %230 = vector.load %arg1[%c7, %c0_69, %c0_70] : memref<8x2x128xf32, #tpu.memory_space<vmem>>, vector<1x2x128xf32>
    %231 = vector.shape_cast %230 : vector<1x2x128xf32> to vector<2x128xf32>
    %cst_71 = arith.constant dense<0.000000e+00> : vector<2x128xf32>
    %232 = tpu.matmul %226, %3, %cst_71 {dimension_numbers = #tpu.dot_dimension_numbers<[1], [0], [0], [1], [0, 0, 1, 1], [], []>} : vector<2x32xf32>, vector<32x128xf32>, vector<2x128xf32> -> vector<2x128xf32>
    %233 = arith.addf %231, %232 : vector<2x128xf32>
    %234 = vector.extract_strided_slice %233 {offsets = [0, 0], sizes = [2, 32], strides = [1, 1]} : vector<2x128xf32> to vector<2x32xf32>
    %235 = arith.negf %234 : vector<2x32xf32>
    %236 = math.exp %235 : vector<2x32xf32>
    %cst_72 = arith.constant 1.000000e+00 : f32
    %237 = vector.broadcast %cst_72 : f32 to vector<2x32xf32>
    %238 = arith.addf %237, %236 : vector<2x32xf32>
    %239 = arith.divf %237, %238 : vector<2x32xf32>
    %240 = vector.extract_strided_slice %233 {offsets = [0, 32], sizes = [2, 32], strides = [1, 1]} : vector<2x128xf32> to vector<2x32xf32>
    %241 = arith.negf %240 : vector<2x32xf32>
    %242 = math.exp %241 : vector<2x32xf32>
    %cst_73 = arith.constant 1.000000e+00 : f32
    %243 = vector.broadcast %cst_73 : f32 to vector<2x32xf32>
    %244 = arith.addf %243, %242 : vector<2x32xf32>
    %245 = arith.divf %243, %244 : vector<2x32xf32>
    %246 = vector.extract_strided_slice %233 {offsets = [0, 64], sizes = [2, 32], strides = [1, 1]} : vector<2x128xf32> to vector<2x32xf32>
    %247 = math.tanh %246 : vector<2x32xf32>
    %248 = vector.extract_strided_slice %233 {offsets = [0, 96], sizes = [2, 32], strides = [1, 1]} : vector<2x128xf32> to vector<2x32xf32>
    %249 = arith.negf %248 : vector<2x32xf32>
    %250 = math.exp %249 : vector<2x32xf32>
    %cst_74 = arith.constant 1.000000e+00 : f32
    %251 = vector.broadcast %cst_74 : f32 to vector<2x32xf32>
    %252 = arith.addf %251, %250 : vector<2x32xf32>
    %253 = arith.divf %251, %252 : vector<2x32xf32>
    %254 = arith.mulf %245, %224 : vector<2x32xf32>
    %255 = arith.mulf %239, %247 : vector<2x32xf32>
    %256 = arith.addf %254, %255 : vector<2x32xf32>
    %257 = math.tanh %256 : vector<2x32xf32>
    %258 = arith.mulf %253, %257 : vector<2x32xf32>
    %c7_75 = arith.constant 7 : index
    %c0_76 = arith.constant 0 : index
    %c0_77 = arith.constant 0 : index
    %259 = vector.load %arg3[%c7_75, %c0_76, %c0_77] : memref<8x2x32xf32, #tpu.memory_space<vmem>>, vector<1x2x32xf32>
    %260 = vector.shape_cast %259 : vector<1x2x32xf32> to vector<2x32xf32>
    %261 = vector.shape_cast %258 : vector<2x32xf32> to vector<1x2x32xf32>
    tpu.vector_store %arg3[%c7_75, %c0_76, %c0_77], %261 {strides = array<i32>} : memref<8x2x32xf32, #tpu.memory_space<vmem>>, vector<1x2x32xf32>,
    %c0_78 = arith.constant 0 : index
    %c0_79 = arith.constant 0 : index
    %262 = vector.load %arg4[%c0_78, %c0_79] : memref<2x32xf32, #tpu.memory_space<vmem>>, vector<2x32xf32>
    tpu.vector_store %arg4[%c0_78, %c0_79], %258 {strides = array<i32>} : memref<2x32xf32, #tpu.memory_space<vmem>>, vector<2x32xf32>,
    %c0_80 = arith.constant 0 : index
    %c0_81 = arith.constant 0 : index
    %263 = vector.load %arg5[%c0_80, %c0_81] : memref<2x32xf32, #tpu.memory_space<vmem>>, vector<2x32xf32>
    tpu.vector_store %arg5[%c0_80, %c0_81], %256 {strides = array<i32>} : memref<2x32xf32, #tpu.memory_space<vmem>>, vector<2x32xf32>,
    return
  }
  func.func @transform_0(%arg0: i32) -> (i32, i32, i32) {
    %c0_i32 = arith.constant 0 : i32
    %c0_i32_0 = arith.constant 0 : i32
    %c0_i32_1 = arith.constant 0 : i32
    return %arg0, %c0_i32, %c0_i32_0 : i32, i32, i32
  }
  func.func @transform_1(%arg0: i32) -> (i32, i32) {
    %c0_i32 = arith.constant 0 : i32
    %c0_i32_0 = arith.constant 0 : i32
    %c0_i32_1 = arith.constant 0 : i32
    return %c0_i32, %c0_i32_0 : i32, i32
  }
  func.func @transform_2(%arg0: i32) -> (i32, i32, i32) {
    %c0_i32 = arith.constant 0 : i32
    %c0_i32_0 = arith.constant 0 : i32
    %c0_i32_1 = arith.constant 0 : i32
    return %arg0, %c0_i32, %c0_i32_0 : i32, i32, i32
  }
}

</mosaic_0001>

<llo_original>
// kernel: tpu_custom_call.1
$region0: #{tpu_custom_call.1}
  #allocation0 [shape = 'u32[]', space=smem, size = 0x4, offset = 0x4, fixed_abs, tag = 'smem constant byte address 0x4 - core index']
  #allocation1 [shape = 'u32[144,128]{1,0:T(1,128)}', space=vmem, size = 0x12000, scoped, tag = 'internal scratch']
  #allocation2 [shape = 'f32[2,32]{1,0:T(2,128)}', space=vmem, size = 0x400, scoped, tag = 'scratch operand']
  #allocation3 [shape = 'f32[2,32]{1,0:T(2,128)}', space=vmem, size = 0x400, scoped, tag = 'scratch operand']
  %s0 = inlined_call_operand.hbm [shape: f32[8,2,128], index: 0, kind: input, shape index: {}]
  %s1 = inlined_call_operand.hbm [shape: f32[32,128], index: 1, kind: input, shape index: {}]
  %s2 = inlined_call_operand.hbm [shape: f32[8,2,32], index: 2, kind: output, shape index: {}]
  %s3 = sld [smem:[#allocation0]]
  $region30: #{tpu_custom_call.1} parent=0
    _
  %s5 = ssub.s32 1, %s3
  %s6 = scalar_select 0, %s5, %s3
  $region1: #{tpu_custom_call.1} parent=0
    #allocation4 [shape = 'u8[8192]{0}', space=vmem, size = 0x2000, scoped, tag = 'input window, operand 0, single buffered']
    #allocation5 [shape = 's32[1]{0}', space=sflag, size = 0x4, scoped, tag = 'scoped memory for tpu_custom_call.1']
    #allocation6 [shape = 's32[1]{0}', space=sflag, size = 0x4, scoped, tag = 'scoped memory for tpu_custom_call.1']
    #allocation7 [shape = 'u8[16384]{0}', space=vmem, size = 0x4000, scoped, tag = 'input window, operand 1, single buffered']
    #allocation8 [shape = 's32[1]{0}', space=sflag, size = 0x4, scoped, tag = 'scoped memory for tpu_custom_call.1']
    #allocation9 [shape = 'u8[8192]{0}', space=vmem, size = 0x2000, scoped, tag = 'output window, operand 0, single buffered']
    %7 = vsyncpa [#allocation5], 0
    %8 = vsyncpa [#allocation8], 0
    %9 = vsyncpa [#allocation6], 0
    // Predicated region
    $region2: #{tpu_custom_call.1} parent=1 // pred_check
      _
    $region3: #{tpu_custom_call.1} parent=1 // pred_check_branch
      %11 = sbr.rel (0) target = $region5
    $region4: #{tpu_custom_call.1} parent=1 // pred_region
      %s13 = ssub.s32 256, 256
      %14 = vsyncadd [#allocation5], %s13
      %s15 = sshll.u32 [#allocation4], 4
      %s16 = int_to_ptr.vmem [resolvable:$true] %s15
      %21 = dma.hbm_to_vmem [thread:$0]  %s0, 256, %s16, [#allocation5], 32, 32, 2
    $region5: #{tpu_custom_call.1} parent=1 // pred_fallthru
      _
    // Predicated region
    $region6: #{tpu_custom_call.1} parent=1 // pred_check
      _
    $region7: #{tpu_custom_call.1} parent=1 // pred_check_branch
      %23 = sbr.rel (0) target = $region9
    $region8: #{tpu_custom_call.1} parent=1 // pred_region
      %s25 = ssub.s32 512, 512
      %26 = vsyncadd [#allocation8], %s25
      %s27 = sshll.u32 [#allocation7], 4
      %s28 = int_to_ptr.vmem [resolvable:$true] %s27
      %33 = dma.hbm_to_vmem [thread:$0]  %s1, 512, %s28, [#allocation8], 128, 128, 8
    $region9: #{tpu_custom_call.1} parent=1 // pred_fallthru
      _
    // Predicated region
    $region10: #{tpu_custom_call.1} parent=1 // pred_check
      _
    $region11: #{tpu_custom_call.1} parent=1 // pred_check_branch
      %35 = sbr.rel (0) target = $region13
    $region12: #{tpu_custom_call.1} parent=1 // pred_region
      %36 = dma.done [#allocation5], 256
    $region13: #{tpu_custom_call.1} parent=1 // pred_fallthru
      _
    // Predicated region
    $region14: #{tpu_custom_call.1} parent=1 // pred_check
      _
    $region15: #{tpu_custom_call.1} parent=1 // pred_check_branch
      %38 = sbr.rel (0) target = $region17
    $region16: #{tpu_custom_call.1} parent=1 // pred_region
      %39 = dma.done [#allocation8], 512
    $region17: #{tpu_custom_call.1} parent=1 // pred_fallthru
      _
    %p40 = scmp.eq.s32.totalorder 0, 0
    // Predicated region
    $region18: #{tpu_custom_call.1} parent=1 // pred_check
      %p41 = pneg %p40
    $region19: #{tpu_custom_call.1} parent=1 // pred_check_branch
      %43 = sbr.rel (%p41) target = $region21
    $region20: #{tpu_custom_call.1} parent=1 // pred_region
      %vm44 = vcmask 254976
      %45 = vst.msk [vmem:[#allocation2] sm:$0x3] %vm44, 0.0
      %46 = vst.msk [vmem:[#allocation3] sm:$0x3] %vm44, 0.0
    $region21: #{tpu_custom_call.1} parent=1 // pred_fallthru
      _
    %v47 = vld [vmem:[#allocation7] sm:$0xff]
    %v48 = vld [vmem:[#allocation7 + $0x8] sm:$0xff]
    %v49 = vld [vmem:[#allocation7 + $0x10] sm:$0xff]
    %v50 = vld [vmem:[#allocation7 + $0x18] sm:$0xff]
    %v51 = vld [vmem:[#allocation2] sm:$0x3]
    %v52 = vld [vmem:[#allocation3] sm:$0x3]
    %v53 = vld [vmem:[#allocation4] sm:$0x3]
    %vm54 = vcmask 261120
    %v56 = vsel %vm54, %v51, 0
    %58 = vmatprep.subr.mxu0 0.0
    %59 = vmatpush1.msra.mxu0 %v47
    %60 = vmatprep.subr.mxu0 0.0
    %61 = vmatpush1.msra.mxu0 %v48
    %62 = vmatprep.subr.mxu0 0.0
    %63 = vmatpush1.msra.mxu0 %v49
    %64 = vmatprep.subr.mxu0 0.0
    %65 = vmatpush1.msra.mxu0 %v50
    %66 = vmatprep.subr.mxu0 0.0
    %67 = vmatpush1.msra.mxu0 0.0
    %68 = vmatprep.subr.mxu0 0.0
    %69 = vmatpush1.msra.mxu0 0.0
    %70 = vmatprep.subr.mxu0 0.0
    %71 = vmatpush1.msra.mxu0 0.0
    %72 = vmatprep.subr.mxu0 0.0
    %73 = vmatpush1.msra.mxu0 0.0
    %74 = vmatprep.subr.mxu0 0.0
    %75 = vmatpush1.msra.mxu0 0.0
    %76 = vmatprep.subr.mxu0 0.0
    %77 = vmatpush1.msra.mxu0 0.0
    %78 = vmatprep.subr.mxu0 0.0
    %79 = vmatpush1.msra.mxu0 0.0
    %80 = vmatprep.subr.mxu0 0.0
    %81 = vmatpush1.msra.mxu0 0.0
    %82 = vmatprep.subr.mxu0 0.0
    %83 = vmatpush1.msra.mxu0 0.0
    %84 = vmatprep.subr.mxu0 0.0
    %85 = vmatpush1.msra.mxu0 0.0
    %86 = vmatprep.subr.mxu0 0.0
    %87 = vmatpush1.msra.mxu0 0.0
    %88 = vmatprep.subr.mxu0 0.0
    %89 = vmatpush1.msra.mxu0 0.0
    %90 = vmatprep.subr.mxu0 0.0
    %91 = vmatpush1.msra.mxu0 0.0
    %92 = vmatprep.subr.mxu0 0.0
    %93 = vmatpush1.msra.mxu0 0.0
    %94 = vmatprep.subr.mxu0 0.0
    %95 = vmatpush1.msra.mxu0 0.0
    %96 = vmatprep.subr.mxu0 0.0
    %97 = vmatpush1.msra.mxu0 0.0
    %98 = vmatprep.subr.mxu0 0.0
    %99 = vmatpush1.msra.mxu0 0.0
    %100 = vmatprep.subr.mxu0 0.0
    %101 = vmatpush1.msra.mxu0 0.0
    %102 = vmatprep.subr.mxu0 0.0
    %103 = vmatpush1.msra.mxu0 0.0
    %104 = vmatprep.subr.mxu0 0.0
    %105 = vmatpush1.msra.mxu0 0.0
    %106 = vmatprep.subr.mxu0 0.0
    %107 = vmatpush1.msra.mxu0 0.0
    %108 = vmatprep.subr.mxu0 0.0
    %109 = vmatpush1.msra.mxu0 0.0
    %110 = vmatprep.subr.mxu0 0.0
    %111 = vmatpush1.msra.mxu0 0.0
    %112 = vmatprep.subr.mxu0 0.0
    %113 = vmatpush1.msra.mxu0 0.0
    %114 = vmatprep.subr.mxu0 0.0
    %115 = vmatpush1.msra.mxu0 0.0
    %116 = vmatprep.subr.mxu0 0.0
    %117 = vmatpush1.msra.mxu0 0.0
    %118 = vmatprep.subr.mxu0 0.0
    %119 = vmatpush1.msra.mxu0 0.0
    %120 = vmatprep.subr.mxu0 0.0
    %121 = vmatpush1.msra.mxu0 0.0
    %122 = vmatprep.mubr.f32.mxu0 0.0
    %123 = vmatmul.mubr.f32.gmra.mrb[0].mxu0 %v56
    %v124 = vpop.f32.mrb[0].mxu0
    %v125 = vadd.f32 0.0, %v124
    %v126 = vpop.f32.mrb[0].mxu0
    %127 = vdwg.mxu0
    %v128 = vadd.f32 %v53, %v125
    %v129 = vxor.u32 %v128, 2147483648
    %v130 = vmul.f32 %v129, 1.442695
    %v131 = vpow.pop %v130
    %v132 = vadd.f32 %v131, 1.0
    %v133 = vrcp.pop %v132
    %v134 = vmul.f32 1.0, %v133
    %v135 = vtanh.pop %v128
    %137 = vrot.lane.b32.xlu0 %v52, 32
    %v138 = vpop.permute.xlu0 %137
    %v140 = vmul.f32 %v134, %v138
    %142 = vrot.lane.b32.xlu0 %v135, 64
    %v143 = vpop.permute.xlu0 %142
    %v145 = vmul.f32 %v134, %v143
    %147 = vrot.lane.b32.xlu0 %v145, 32
    %v148 = vpop.permute.xlu0 %147
    %v150 = vadd.f32 %v140, %v148
    %v151 = vtanh.pop %v150
    %153 = vrot.lane.b32.xlu0 %v151, 64
    %v154 = vpop.permute.xlu0 %153
    %v156 = vmul.f32 %v134, %v154
    %158 = vrot.lane.b32.xlu0 %v156, 32
    %v159 = vpop.permute.xlu0 %158
    %vm161 = vcmask 254976
    %162 = vst.msk [vmem:[#allocation9] sm:$0x3] %vm161, %v159
    %s163 = scalar_lea.vmem [#allocation4], 2
    %v164 = vld [vmem:[%s163] sm:$0x3]
    %v165 = vsel %vm54, %v159, 0
    %167 = vmatprep.subr.mxu0 0.0
    %168 = vmatpush1.msra.mxu0 %v47
    %169 = vmatprep.subr.mxu0 0.0
    %170 = vmatpush1.msra.mxu0 %v48
    %171 = vmatprep.subr.mxu0 0.0
    %172 = vmatpush1.msra.mxu0 %v49
    %173 = vmatprep.subr.mxu0 0.0
    %174 = vmatpush1.msra.mxu0 %v50
    %175 = vmatprep.subr.mxu0 0.0
    %176 = vmatpush1.msra.mxu0 0.0
    %177 = vmatprep.subr.mxu0 0.0
    %178 = vmatpush1.msra.mxu0 0.0
    %179 = vmatprep.subr.mxu0 0.0
    %180 = vmatpush1.msra.mxu0 0.0
    %181 = vmatprep.subr.mxu0 0.0
    %182 = vmatpush1.msra.mxu0 0.0
    %183 = vmatprep.subr.mxu0 0.0
    %184 = vmatpush1.msra.mxu0 0.0
    %185 = vmatprep.subr.mxu0 0.0
    %186 = vmatpush1.msra.mxu0 0.0
    %187 = vmatprep.subr.mxu0 0.0
    %188 = vmatpush1.msra.mxu0 0.0
    %189 = vmatprep.subr.mxu0 0.0
    %190 = vmatpush1.msra.mxu0 0.0
    %191 = vmatprep.subr.mxu0 0.0
    %192 = vmatpush1.msra.mxu0 0.0
    %193 = vmatprep.subr.mxu0 0.0
    %194 = vmatpush1.msra.mxu0 0.0
    %195 = vmatprep.subr.mxu0 0.0
    %196 = vmatpush1.msra.mxu0 0.0
    %197 = vmatprep.subr.mxu0 0.0
    %198 = vmatpush1.msra.mxu0 0.0
    %199 = vmatprep.subr.mxu0 0.0
    %200 = vmatpush1.msra.mxu0 0.0
    %201 = vmatprep.subr.mxu0 0.0
    %202 = vmatpush1.msra.mxu0 0.0
    %203 = vmatprep.subr.mxu0 0.0
    %204 = vmatpush1.msra.mxu0 0.0
    %205 = vmatprep.subr.mxu0 0.0
    %206 = vmatpush1.msra.mxu0 0.0
    %207 = vmatprep.subr.mxu0 0.0
    %208 = vmatpush1.msra.mxu0 0.0
    %209 = vmatprep.subr.mxu0 0.0
    %210 = vmatpush1.msra.mxu0 0.0
    %211 = vmatprep.subr.mxu0 0.0
    %212 = vmatpush1.msra.mxu0 0.0
    %213 = vmatprep.subr.mxu0 0.0
    %214 = vmatpush1.msra.mxu0 0.0
    %215 = vmatprep.subr.mxu0 0.0
    %216 = vmatpush1.msra.mxu0 0.0
    %217 = vmatprep.subr.mxu0 0.0
    %218 = vmatpush1.msra.mxu0 0.0
    %219 = vmatprep.subr.mxu0 0.0
    %220 = vmatpush1.msra.mxu0 0.0
    %221 = vmatprep.subr.mxu0 0.0
    %222 = vmatpush1.msra.mxu0 0.0
    %223 = vmatprep.subr.mxu0 0.0
    %224 = vmatpush1.msra.mxu0 0.0
    %225 = vmatprep.subr.mxu0 0.0
    %226 = vmatpush1.msra.mxu0 0.0
    %227 = vmatprep.subr.mxu0 0.0
    %228 = vmatpush1.msra.mxu0 0.0
    %229 = vmatprep.subr.mxu0 0.0
    %230 = vmatpush1.msra.mxu0 0.0
    %231 = vmatprep.mubr.f32.mxu0 0.0
    %232 = vmatmul.mubr.f32.gmra.mrb[0].mxu0 %v165
    %v233 = vpop.f32.mrb[0].mxu0
    %v234 = vadd.f32 0.0, %v233
    %v235 = vpop.f32.mrb[0].mxu0
    %236 = vdwg.mxu0
    %v237 = vadd.f32 %v164, %v234
    %v238 = vxor.u32 %v237, 2147483648
    %v239 = vmul.f32 %v238, 1.442695
    %v240 = vpow.pop %v239
    %v241 = vadd.f32 %v240, 1.0
    %v242 = vrcp.pop %v241
    %v243 = vmul.f32 1.0, %v242
    %v244 = vtanh.pop %v237
    %v245 = vmul.f32 %v243, %v150
    %247 = vrot.lane.b32.xlu0 %v244, 64
    %v248 = vpop.permute.xlu0 %247
    %v250 = vmul.f32 %v243, %v248
    %252 = vrot.lane.b32.xlu0 %v250, 32
    %v253 = vpop.permute.xlu0 %252
    %v255 = vadd.f32 %v245, %v253
    %v256 = vtanh.pop %v255
    %258 = vrot.lane.b32.xlu0 %v256, 64
    %v259 = vpop.permute.xlu0 %258
    %v261 = vmul.f32 %v243, %v259
    %263 = vrot.lane.b32.xlu0 %v261, 32
    %v264 = vpop.permute.xlu0 %263
    %s266 = scalar_lea.vmem [#allocation9], 2
    %267 = vst.msk [vmem:[%s266] sm:$0x3] %vm161, %v264
    %s268 = scalar_lea.vmem [#allocation4], 4
    %v269 = vld [vmem:[%s268] sm:$0x3]
    %v270 = vsel %vm54, %v264, 0
    %272 = vmatprep.subr.mxu0 0.0
    %273 = vmatpush1.msra.mxu0 %v47
    %274 = vmatprep.subr.mxu0 0.0
    %275 = vmatpush1.msra.mxu0 %v48
    %276 = vmatprep.subr.mxu0 0.0
    %277 = vmatpush1.msra.mxu0 %v49
    %278 = vmatprep.subr.mxu0 0.0
    %279 = vmatpush1.msra.mxu0 %v50
    %280 = vmatprep.subr.mxu0 0.0
    %281 = vmatpush1.msra.mxu0 0.0
    %282 = vmatprep.subr.mxu0 0.0
    %283 = vmatpush1.msra.mxu0 0.0
    %284 = vmatprep.subr.mxu0 0.0
    %285 = vmatpush1.msra.mxu0 0.0
    %286 = vmatprep.subr.mxu0 0.0
    %287 = vmatpush1.msra.mxu0 0.0
    %288 = vmatprep.subr.mxu0 0.0
    %289 = vmatpush1.msra.mxu0 0.0
    %290 = vmatprep.subr.mxu0 0.0
    %291 = vmatpush1.msra.mxu0 0.0
    %292 = vmatprep.subr.mxu0 0.0
    %293 = vmatpush1.msra.mxu0 0.0
    %294 = vmatprep.subr.mxu0 0.0
    %295 = vmatpush1.msra.mxu0 0.0
    %296 = vmatprep.subr.mxu0 0.0
    %297 = vmatpush1.msra.mxu0 0.0
    %298 = vmatprep.subr.mxu0 0.0
    %299 = vmatpush1.msra.mxu0 0.0
    %300 = vmatprep.subr.mxu0 0.0
    %301 = vmatpush1.msra.mxu0 0.0
    %302 = vmatprep.subr.mxu0 0.0
    %303 = vmatpush1.msra.mxu0 0.0
    %304 = vmatprep.subr.mxu0 0.0
    %305 = vmatpush1.msra.mxu0 0.0
    %306 = vmatprep.subr.mxu0 0.0
    %307 = vmatpush1.msra.mxu0 0.0
    %308 = vmatprep.subr.mxu0 0.0
    %309 = vmatpush1.msra.mxu0 0.0
    %310 = vmatprep.subr.mxu0 0.0
    %311 = vmatpush1.msra.mxu0 0.0
    %312 = vmatprep.subr.mxu0 0.0
    %313 = vmatpush1.msra.mxu0 0.0
    %314 = vmatprep.subr.mxu0 0.0
    %315 = vmatpush1.msra.mxu0 0.0
    %316 = vmatprep.subr.mxu0 0.0
    %317 = vmatpush1.msra.mxu0 0.0
    %318 = vmatprep.subr.mxu0 0.0
    %319 = vmatpush1.msra.mxu0 0.0
    %320 = vmatprep.subr.mxu0 0.0
    %321 = vmatpush1.msra.mxu0 0.0
    %322 = vmatprep.subr.mxu0 0.0
    %323 = vmatpush1.msra.mxu0 0.0
    %324 = vmatprep.subr.mxu0 0.0
    %325 = vmatpush1.msra.mxu0 0.0
    %326 = vmatprep.subr.mxu0 0.0
    %327 = vmatpush1.msra.mxu0 0.0
    %328 = vmatprep.subr.mxu0 0.0
    %329 = vmatpush1.msra.mxu0 0.0
    %330 = vmatprep.subr.mxu0 0.0
    %331 = vmatpush1.msra.mxu0 0.0
    %332 = vmatprep.subr.mxu0 0.0
    %333 = vmatpush1.msra.mxu0 0.0
    %334 = vmatprep.subr.mxu0 0.0
    %335 = vmatpush1.msra.mxu0 0.0
    %336 = vmatprep.mubr.f32.mxu0 0.0
    %337 = vmatmul.mubr.f32.gmra.mrb[0].mxu0 %v270
    %v338 = vpop.f32.mrb[0].mxu0
    %v339 = vadd.f32 0.0, %v338
    %v340 = vpop.f32.mrb[0].mxu0
    %341 = vdwg.mxu0
    %v342 = vadd.f32 %v269, %v339
    %v343 = vxor.u32 %v342, 2147483648
    %v344 = vmul.f32 %v343, 1.442695
    %v345 = vpow.pop %v344
    %v346 = vadd.f32 %v345, 1.0
    %v347 = vrcp.pop %v346
    %v348 = vmul.f32 1.0, %v347
    %v349 = vtanh.pop %v342
    %v350 = vmul.f32 %v348, %v255
    %352 = vrot.lane.b32.xlu0 %v349, 64
    %v353 = vpop.permute.xlu0 %352
    %v355 = vmul.f32 %v348, %v353
    %357 = vrot.lane.b32.xlu0 %v355, 32
    %v358 = vpop.permute.xlu0 %357
    %v360 = vadd.f32 %v350, %v358
    %v361 = vtanh.pop %v360
    %363 = vrot.lane.b32.xlu0 %v361, 64
    %v364 = vpop.permute.xlu0 %363
    %v366 = vmul.f32 %v348, %v364
    %368 = vrot.lane.b32.xlu0 %v366, 32
    %v369 = vpop.permute.xlu0 %368
    %s371 = scalar_lea.vmem [#allocation9], 4
    %372 = vst.msk [vmem:[%s371] sm:$0x3] %vm161, %v369
    %s373 = scalar_lea.vmem [#allocation4], 6
    %v374 = vld [vmem:[%s373] sm:$0x3]
    %v375 = vsel %vm54, %v369, 0
    %377 = vmatprep.subr.mxu0 0.0
    %378 = vmatpush1.msra.mxu0 %v47
    %379 = vmatprep.subr.mxu0 0.0
    %380 = vmatpush1.msra.mxu0 %v48
    %381 = vmatprep.subr.mxu0 0.0
    %382 = vmatpush1.msra.mxu0 %v49
    %383 = vmatprep.subr.mxu0 0.0
    %384 = vmatpush1.msra.mxu0 %v50
    %385 = vmatprep.subr.mxu0 0.0
    %386 = vmatpush1.msra.mxu0 0.0
    %387 = vmatprep.subr.mxu0 0.0
    %388 = vmatpush1.msra.mxu0 0.0
    %389 = vmatprep.subr.mxu0 0.0
    %390 = vmatpush1.msra.mxu0 0.0
    %391 = vmatprep.subr.mxu0 0.0
    %392 = vmatpush1.msra.mxu0 0.0
    %393 = vmatprep.subr.mxu0 0.0
    %394 = vmatpush1.msra.mxu0 0.0
    %395 = vmatprep.subr.mxu0 0.0
    %396 = vmatpush1.msra.mxu0 0.0
    %397 = vmatprep.subr.mxu0 0.0
    %398 = vmatpush1.msra.mxu0 0.0
    %399 = vmatprep.subr.mxu0 0.0
    %400 = vmatpush1.msra.mxu0 0.0
    %401 = vmatprep.subr.mxu0 0.0
    %402 = vmatpush1.msra.mxu0 0.0
    %403 = vmatprep.subr.mxu0 0.0
    %404 = vmatpush1.msra.mxu0 0.0
    %405 = vmatprep.subr.mxu0 0.0
    %406 = vmatpush1.msra.mxu0 0.0
    %407 = vmatprep.subr.mxu0 0.0
    %408 = vmatpush1.msra.mxu0 0.0
    %409 = vmatprep.subr.mxu0 0.0
    %410 = vmatpush1.msra.mxu0 0.0
    %411 = vmatprep.subr.mxu0 0.0
    %412 = vmatpush1.msra.mxu0 0.0
    %413 = vmatprep.subr.mxu0 0.0
    %414 = vmatpush1.msra.mxu0 0.0
    %415 = vmatprep.subr.mxu0 0.0
    %416 = vmatpush1.msra.mxu0 0.0
    %417 = vmatprep.subr.mxu0 0.0
    %418 = vmatpush1.msra.mxu0 0.0
    %419 = vmatprep.subr.mxu0 0.0
    %420 = vmatpush1.msra.mxu0 0.0
    %421 = vmatprep.subr.mxu0 0.0
    %422 = vmatpush1.msra.mxu0 0.0
    %423 = vmatprep.subr.mxu0 0.0
    %424 = vmatpush1.msra.mxu0 0.0
    %425 = vmatprep.subr.mxu0 0.0
    %426 = vmatpush1.msra.mxu0 0.0
    %427 = vmatprep.subr.mxu0 0.0
    %428 = vmatpush1.msra.mxu0 0.0
    %429 = vmatprep.subr.mxu0 0.0
    %430 = vmatpush1.msra.mxu0 0.0
    %431 = vmatprep.subr.mxu0 0.0
    %432 = vmatpush1.msra.mxu0 0.0
    %433 = vmatprep.subr.mxu0 0.0
    %434 = vmatpush1.msra.mxu0 0.0
    %435 = vmatprep.subr.mxu0 0.0
    %436 = vmatpush1.msra.mxu0 0.0
    %437 = vmatprep.subr.mxu0 0.0
    %438 = vmatpush1.msra.mxu0 0.0
    %439 = vmatprep.subr.mxu0 0.0
    %440 = vmatpush1.msra.mxu0 0.0
    %441 = vmatprep.mubr.f32.mxu0 0.0
    %442 = vmatmul.mubr.f32.gmra.mrb[0].mxu0 %v375
    %v443 = vpop.f32.mrb[0].mxu0
    %v444 = vadd.f32 0.0, %v443
    %v445 = vpop.f32.mrb[0].mxu0
    %446 = vdwg.mxu0
    %v447 = vadd.f32 %v374, %v444
    %v448 = vxor.u32 %v447, 2147483648
    %v449 = vmul.f32 %v448, 1.442695
    %v450 = vpow.pop %v449
    %v451 = vadd.f32 %v450, 1.0
    %v452 = vrcp.pop %v451
    %v453 = vmul.f32 1.0, %v452
    %v454 = vtanh.pop %v447
    %v455 = vmul.f32 %v453, %v360
    %457 = vrot.lane.b32.xlu0 %v454, 64
    %v458 = vpop.permute.xlu0 %457
    %v460 = vmul.f32 %v453, %v458
    %462 = vrot.lane.b32.xlu0 %v460, 32
    %v463 = vpop.permute.xlu0 %462
    %v465 = vadd.f32 %v455, %v463
    %v466 = vtanh.pop %v465
    %468 = vrot.lane.b32.xlu0 %v466, 64
    %v469 = vpop.permute.xlu0 %468
    %v471 = vmul.f32 %v453, %v469
    %473 = vrot.lane.b32.xlu0 %v471, 32
    %v474 = vpop.permute.xlu0 %473
    %s476 = scalar_lea.vmem [#allocation9], 6
    %477 = vst.msk [vmem:[%s476] sm:$0x3] %vm161, %v474
    %s478 = scalar_lea.vmem [#allocation4], 8
    %v479 = vld [vmem:[%s478] sm:$0x3]
    %v480 = vsel %vm54, %v474, 0
    %482 = vmatprep.subr.mxu0 0.0
    %483 = vmatpush1.msra.mxu0 %v47
    %484 = vmatprep.subr.mxu0 0.0
    %485 = vmatpush1.msra.mxu0 %v48
    %486 = vmatprep.subr.mxu0 0.0
    %487 = vmatpush1.msra.mxu0 %v49
    %488 = vmatprep.subr.mxu0 0.0
    %489 = vmatpush1.msra.mxu0 %v50
    %490 = vmatprep.subr.mxu0 0.0
    %491 = vmatpush1.msra.mxu0 0.0
    %492 = vmatprep.subr.mxu0 0.0
    %493 = vmatpush1.msra.mxu0 0.0
    %494 = vmatprep.subr.mxu0 0.0
    %495 = vmatpush1.msra.mxu0 0.0
    %496 = vmatprep.subr.mxu0 0.0
    %497 = vmatpush1.msra.mxu0 0.0
    %498 = vmatprep.subr.mxu0 0.0
    %499 = vmatpush1.msra.mxu0 0.0
    %500 = vmatprep.subr.mxu0 0.0
    %501 = vmatpush1.msra.mxu0 0.0
    %502 = vmatprep.subr.mxu0 0.0
    %503 = vmatpush1.msra.mxu0 0.0
    %504 = vmatprep.subr.mxu0 0.0
    %505 = vmatpush1.msra.mxu0 0.0
    %506 = vmatprep.subr.mxu0 0.0
    %507 = vmatpush1.msra.mxu0 0.0
    %508 = vmatprep.subr.mxu0 0.0
    %509 = vmatpush1.msra.mxu0 0.0
    %510 = vmatprep.subr.mxu0 0.0
    %511 = vmatpush1.msra.mxu0 0.0
    %512 = vmatprep.subr.mxu0 0.0
    %513 = vmatpush1.msra.mxu0 0.0
    %514 = vmatprep.subr.mxu0 0.0
    %515 = vmatpush1.msra.mxu0 0.0
    %516 = vmatprep.subr.mxu0 0.0
    %517 = vmatpush1.msra.mxu0 0.0
    %518 = vmatprep.subr.mxu0 0.0
    %519 = vmatpush1.msra.mxu0 0.0
    %520 = vmatprep.subr.mxu0 0.0
    %521 = vmatpush1.msra.mxu0 0.0
    %522 = vmatprep.subr.mxu0 0.0
    %523 = vmatpush1.msra.mxu0 0.0
    %524 = vmatprep.subr.mxu0 0.0
    %525 = vmatpush1.msra.mxu0 0.0
    %526 = vmatprep.subr.mxu0 0.0
    %527 = vmatpush1.msra.mxu0 0.0
    %528 = vmatprep.subr.mxu0 0.0
    %529 = vmatpush1.msra.mxu0 0.0
    %530 = vmatprep.subr.mxu0 0.0
    %531 = vmatpush1.msra.mxu0 0.0
    %532 = vmatprep.subr.mxu0 0.0
    %533 = vmatpush1.msra.mxu0 0.0
    %534 = vmatprep.subr.mxu0 0.0
    %535 = vmatpush1.msra.mxu0 0.0
    %536 = vmatprep.subr.mxu0 0.0
    %537 = vmatpush1.msra.mxu0 0.0
    %538 = vmatprep.subr.mxu0 0.0
    %539 = vmatpush1.msra.mxu0 0.0
    %540 = vmatprep.subr.mxu0 0.0
    %541 = vmatpush1.msra.mxu0 0.0
    %542 = vmatprep.subr.mxu0 0.0
    %543 = vmatpush1.msra.mxu0 0.0
    %544 = vmatprep.subr.mxu0 0.0
    %545 = vmatpush1.msra.mxu0 0.0
    %546 = vmatprep.mubr.f32.mxu0 0.0
    %547 = vmatmul.mubr.f32.gmra.mrb[0].mxu0 %v480
    %v548 = vpop.f32.mrb[0].mxu0
    %v549 = vadd.f32 0.0, %v548
    %v550 = vpop.f32.mrb[0].mxu0
    %551 = vdwg.mxu0
    %v552 = vadd.f32 %v479, %v549
    %v553 = vxor.u32 %v552, 2147483648
    %v554 = vmul.f32 %v553, 1.442695
    %v555 = vpow.pop %v554
    %v556 = vadd.f32 %v555, 1.0
    %v557 = vrcp.pop %v556
    %v558 = vmul.f32 1.0, %v557
    %v559 = vtanh.pop %v552
    %v560 = vmul.f32 %v558, %v465
    %562 = vrot.lane.b32.xlu0 %v559, 64
    %v563 = vpop.permute.xlu0 %562
    %v565 = vmul.f32 %v558, %v563
    %567 = vrot.lane.b32.xlu0 %v565, 32
    %v568 = vpop.permute.xlu0 %567
    %v570 = vadd.f32 %v560, %v568
    %v571 = vtanh.pop %v570
    %573 = vrot.lane.b32.xlu0 %v571, 64
    %v574 = vpop.permute.xlu0 %573
    %v576 = vmul.f32 %v558, %v574
    %578 = vrot.lane.b32.xlu0 %v576, 32
    %v579 = vpop.permute.xlu0 %578
    %s581 = scalar_lea.vmem [#allocation9], 8
    %582 = vst.msk [vmem:[%s581] sm:$0x3] %vm161, %v579
    %s583 = scalar_lea.vmem [#allocation4], 10
    %v584 = vld [vmem:[%s583] sm:$0x3]
    %v585 = vsel %vm54, %v579, 0
    %587 = vmatprep.subr.mxu0 0.0
    %588 = vmatpush1.msra.mxu0 %v47
    %589 = vmatprep.subr.mxu0 0.0
    %590 = vmatpush1.msra.mxu0 %v48
    %591 = vmatprep.subr.mxu0 0.0
    %592 = vmatpush1.msra.mxu0 %v49
    %593 = vmatprep.subr.mxu0 0.0
    %594 = vmatpush1.msra.mxu0 %v50
    %595 = vmatprep.subr.mxu0 0.0
    %596 = vmatpush1.msra.mxu0 0.0
    %597 = vmatprep.subr.mxu0 0.0
    %598 = vmatpush1.msra.mxu0 0.0
    %599 = vmatprep.subr.mxu0 0.0
    %600 = vmatpush1.msra.mxu0 0.0
    %601 = vmatprep.subr.mxu0 0.0
    %602 = vmatpush1.msra.mxu0 0.0
    %603 = vmatprep.subr.mxu0 0.0
    %604 = vmatpush1.msra.mxu0 0.0
    %605 = vmatprep.subr.mxu0 0.0
    %606 = vmatpush1.msra.mxu0 0.0
    %607 = vmatprep.subr.mxu0 0.0
    %608 = vmatpush1.msra.mxu0 0.0
    %609 = vmatprep.subr.mxu0 0.0
    %610 = vmatpush1.msra.mxu0 0.0
    %611 = vmatprep.subr.mxu0 0.0
    %612 = vmatpush1.msra.mxu0 0.0
    %613 = vmatprep.subr.mxu0 0.0
    %614 = vmatpush1.msra.mxu0 0.0
    %615 = vmatprep.subr.mxu0 0.0
    %616 = vmatpush1.msra.mxu0 0.0
    %617 = vmatprep.subr.mxu0 0.0
    %618 = vmatpush1.msra.mxu0 0.0
    %619 = vmatprep.subr.mxu0 0.0
    %620 = vmatpush1.msra.mxu0 0.0
    %621 = vmatprep.subr.mxu0 0.0
    %622 = vmatpush1.msra.mxu0 0.0
    %623 = vmatprep.subr.mxu0 0.0
    %624 = vmatpush1.msra.mxu0 0.0
    %625 = vmatprep.subr.mxu0 0.0
    %626 = vmatpush1.msra.mxu0 0.0
    %627 = vmatprep.subr.mxu0 0.0
    %628 = vmatpush1.msra.mxu0 0.0
    %629 = vmatprep.subr.mxu0 0.0
    %630 = vmatpush1.msra.mxu0 0.0
    %631 = vmatprep.subr.mxu0 0.0
    %632 = vmatpush1.msra.mxu0 0.0
    %633 = vmatprep.subr.mxu0 0.0
    %634 = vmatpush1.msra.mxu0 0.0
    %635 = vmatprep.subr.mxu0 0.0
    %636 = vmatpush1.msra.mxu0 0.0
    %637 = vmatprep.subr.mxu0 0.0
    %638 = vmatpush1.msra.mxu0 0.0
    %639 = vmatprep.subr.mxu0 0.0
    %640 = vmatpush1.msra.mxu0 0.0
    %641 = vmatprep.subr.mxu0 0.0
    %642 = vmatpush1.msra.mxu0 0.0
    %643 = vmatprep.subr.mxu0 0.0
    %644 = vmatpush1.msra.mxu0 0.0
    %645 = vmatprep.subr.mxu0 0.0
    %646 = vmatpush1.msra.mxu0 0.0
    %647 = vmatprep.subr.mxu0 0.0
    %648 = vmatpush1.msra.mxu0 0.0
    %649 = vmatprep.subr.mxu0 0.0
    %650 = vmatpush1.msra.mxu0 0.0
    %651 = vmatprep.mubr.f32.mxu0 0.0
    %652 = vmatmul.mubr.f32.gmra.mrb[0].mxu0 %v585
    %v653 = vpop.f32.mrb[0].mxu0
    %v654 = vadd.f32 0.0, %v653
    %v655 = vpop.f32.mrb[0].mxu0
    %656 = vdwg.mxu0
    %v657 = vadd.f32 %v584, %v654
    %v658 = vxor.u32 %v657, 2147483648
    %v659 = vmul.f32 %v658, 1.442695
    %v660 = vpow.pop %v659
    %v661 = vadd.f32 %v660, 1.0
    %v662 = vrcp.pop %v661
    %v663 = vmul.f32 1.0, %v662
    %v664 = vtanh.pop %v657
    %v665 = vmul.f32 %v663, %v570
    %667 = vrot.lane.b32.xlu0 %v664, 64
    %v668 = vpop.permute.xlu0 %667
    %v670 = vmul.f32 %v663, %v668
    %672 = vrot.lane.b32.xlu0 %v670, 32
    %v673 = vpop.permute.xlu0 %672
    %v675 = vadd.f32 %v665, %v673
    %v676 = vtanh.pop %v675
    %678 = vrot.lane.b32.xlu0 %v676, 64
    %v679 = vpop.permute.xlu0 %678
    %v681 = vmul.f32 %v663, %v679
    %683 = vrot.lane.b32.xlu0 %v681, 32
    %v684 = vpop.permute.xlu0 %683
    %s686 = scalar_lea.vmem [#allocation9], 10
    %687 = vst.msk [vmem:[%s686] sm:$0x3] %vm161, %v684
    %s688 = scalar_lea.vmem [#allocation4], 12
    %v689 = vld [vmem:[%s688] sm:$0x3]
    %v690 = vsel %vm54, %v684, 0
    %692 = vmatprep.subr.mxu0 0.0
    %693 = vmatpush1.msra.mxu0 %v47
    %694 = vmatprep.subr.mxu0 0.0
    %695 = vmatpush1.msra.mxu0 %v48
    %696 = vmatprep.subr.mxu0 0.0
    %697 = vmatpush1.msra.mxu0 %v49
    %698 = vmatprep.subr.mxu0 0.0
    %699 = vmatpush1.msra.mxu0 %v50
    %700 = vmatprep.subr.mxu0 0.0
    %701 = vmatpush1.msra.mxu0 0.0
    %702 = vmatprep.subr.mxu0 0.0
    %703 = vmatpush1.msra.mxu0 0.0
    %704 = vmatprep.subr.mxu0 0.0
    %705 = vmatpush1.msra.mxu0 0.0
    %706 = vmatprep.subr.mxu0 0.0
    %707 = vmatpush1.msra.mxu0 0.0
    %708 = vmatprep.subr.mxu0 0.0
    %709 = vmatpush1.msra.mxu0 0.0
    %710 = vmatprep.subr.mxu0 0.0
    %711 = vmatpush1.msra.mxu0 0.0
    %712 = vmatprep.subr.mxu0 0.0
    %713 = vmatpush1.msra.mxu0 0.0
    %714 = vmatprep.subr.mxu0 0.0
    %715 = vmatpush1.msra.mxu0 0.0
    %716 = vmatprep.subr.mxu0 0.0
    %717 = vmatpush1.msra.mxu0 0.0
    %718 = vmatprep.subr.mxu0 0.0
    %719 = vmatpush1.msra.mxu0 0.0
    %720 = vmatprep.subr.mxu0 0.0
    %721 = vmatpush1.msra.mxu0 0.0
    %722 = vmatprep.subr.mxu0 0.0
    %723 = vmatpush1.msra.mxu0 0.0
    %724 = vmatprep.subr.mxu0 0.0
    %725 = vmatpush1.msra.mxu0 0.0
    %726 = vmatprep.subr.mxu0 0.0
    %727 = vmatpush1.msra.mxu0 0.0
    %728 = vmatprep.subr.mxu0 0.0
    %729 = vmatpush1.msra.mxu0 0.0
    %730 = vmatprep.subr.mxu0 0.0
    %731 = vmatpush1.msra.mxu0 0.0
    %732 = vmatprep.subr.mxu0 0.0
    %733 = vmatpush1.msra.mxu0 0.0
    %734 = vmatprep.subr.mxu0 0.0
    %735 = vmatpush1.msra.mxu0 0.0
    %736 = vmatprep.subr.mxu0 0.0
    %737 = vmatpush1.msra.mxu0 0.0
    %738 = vmatprep.subr.mxu0 0.0
    %739 = vmatpush1.msra.mxu0 0.0
    %740 = vmatprep.subr.mxu0 0.0
    %741 = vmatpush1.msra.mxu0 0.0
    %742 = vmatprep.subr.mxu0 0.0
    %743 = vmatpush1.msra.mxu0 0.0
    %744 = vmatprep.subr.mxu0 0.0
    %745 = vmatpush1.msra.mxu0 0.0
    %746 = vmatprep.subr.mxu0 0.0
    %747 = vmatpush1.msra.mxu0 0.0
    %748 = vmatprep.subr.mxu0 0.0
    %749 = vmatpush1.msra.mxu0 0.0
    %750 = vmatprep.subr.mxu0 0.0
    %751 = vmatpush1.msra.mxu0 0.0
    %752 = vmatprep.subr.mxu0 0.0
    %753 = vmatpush1.msra.mxu0 0.0
    %754 = vmatprep.subr.mxu0 0.0
    %755 = vmatpush1.msra.mxu0 0.0
    %756 = vmatprep.mubr.f32.mxu0 0.0
    %757 = vmatmul.mubr.f32.gmra.mrb[0].mxu0 %v690
    %v758 = vpop.f32.mrb[0].mxu0
    %v759 = vadd.f32 0.0, %v758
    %v760 = vpop.f32.mrb[0].mxu0
    %761 = vdwg.mxu0
    %v762 = vadd.f32 %v689, %v759
    %v763 = vxor.u32 %v762, 2147483648
    %v764 = vmul.f32 %v763, 1.442695
    %v765 = vpow.pop %v764
    %v766 = vadd.f32 %v765, 1.0
    %v767 = vrcp.pop %v766
    %v768 = vmul.f32 1.0, %v767
    %v769 = vtanh.pop %v762
    %v770 = vmul.f32 %v768, %v675
    %772 = vrot.lane.b32.xlu0 %v769, 64
    %v773 = vpop.permute.xlu0 %772
    %v775 = vmul.f32 %v768, %v773
    %777 = vrot.lane.b32.xlu0 %v775, 32
    %v778 = vpop.permute.xlu0 %777
    %v780 = vadd.f32 %v770, %v778
    %v781 = vtanh.pop %v780
    %783 = vrot.lane.b32.xlu0 %v781, 64
    %v784 = vpop.permute.xlu0 %783
    %v786 = vmul.f32 %v768, %v784
    %788 = vrot.lane.b32.xlu0 %v786, 32
    %v789 = vpop.permute.xlu0 %788
    %s791 = scalar_lea.vmem [#allocation9], 12
    %792 = vst.msk [vmem:[%s791] sm:$0x3] %vm161, %v789
    %s793 = scalar_lea.vmem [#allocation4], 14
    %v794 = vld [vmem:[%s793] sm:$0x3]
    %v795 = vsel %vm54, %v789, 0
    %797 = vmatprep.subr.mxu0 0.0
    %798 = vmatpush1.msra.mxu0 %v47
    %799 = vmatprep.subr.mxu0 0.0
    %800 = vmatpush1.msra.mxu0 %v48
    %801 = vmatprep.subr.mxu0 0.0
    %802 = vmatpush1.msra.mxu0 %v49
    %803 = vmatprep.subr.mxu0 0.0
    %804 = vmatpush1.msra.mxu0 %v50
    %805 = vmatprep.subr.mxu0 0.0
    %806 = vmatpush1.msra.mxu0 0.0
    %807 = vmatprep.subr.mxu0 0.0
    %808 = vmatpush1.msra.mxu0 0.0
    %809 = vmatprep.subr.mxu0 0.0
    %810 = vmatpush1.msra.mxu0 0.0
    %811 = vmatprep.subr.mxu0 0.0
    %812 = vmatpush1.msra.mxu0 0.0
    %813 = vmatprep.subr.mxu0 0.0
    %814 = vmatpush1.msra.mxu0 0.0
    %815 = vmatprep.subr.mxu0 0.0
    %816 = vmatpush1.msra.mxu0 0.0
    %817 = vmatprep.subr.mxu0 0.0
    %818 = vmatpush1.msra.mxu0 0.0
    %819 = vmatprep.subr.mxu0 0.0
    %820 = vmatpush1.msra.mxu0 0.0
    %821 = vmatprep.subr.mxu0 0.0
    %822 = vmatpush1.msra.mxu0 0.0
    %823 = vmatprep.subr.mxu0 0.0
    %824 = vmatpush1.msra.mxu0 0.0
    %825 = vmatprep.subr.mxu0 0.0
    %826 = vmatpush1.msra.mxu0 0.0
    %827 = vmatprep.subr.mxu0 0.0
    %828 = vmatpush1.msra.mxu0 0.0
    %829 = vmatprep.subr.mxu0 0.0
    %830 = vmatpush1.msra.mxu0 0.0
    %831 = vmatprep.subr.mxu0 0.0
    %832 = vmatpush1.msra.mxu0 0.0
    %833 = vmatprep.subr.mxu0 0.0
    %834 = vmatpush1.msra.mxu0 0.0
    %835 = vmatprep.subr.mxu0 0.0
    %836 = vmatpush1.msra.mxu0 0.0
    %837 = vmatprep.subr.mxu0 0.0
    %838 = vmatpush1.msra.mxu0 0.0
    %839 = vmatprep.subr.mxu0 0.0
    %840 = vmatpush1.msra.mxu0 0.0
    %841 = vmatprep.subr.mxu0 0.0
    %842 = vmatpush1.msra.mxu0 0.0
    %843 = vmatprep.subr.mxu0 0.0
    %844 = vmatpush1.msra.mxu0 0.0
    %845 = vmatprep.subr.mxu0 0.0
    %846 = vmatpush1.msra.mxu0 0.0
    %847 = vmatprep.subr.mxu0 0.0
    %848 = vmatpush1.msra.mxu0 0.0
    %849 = vmatprep.subr.mxu0 0.0
    %850 = vmatpush1.msra.mxu0 0.0
    %851 = vmatprep.subr.mxu0 0.0
    %852 = vmatpush1.msra.mxu0 0.0
    %853 = vmatprep.subr.mxu0 0.0
    %854 = vmatpush1.msra.mxu0 0.0
    %855 = vmatprep.subr.mxu0 0.0
    %856 = vmatpush1.msra.mxu0 0.0
    %857 = vmatprep.subr.mxu0 0.0
    %858 = vmatpush1.msra.mxu0 0.0
    %859 = vmatprep.subr.mxu0 0.0
    %860 = vmatpush1.msra.mxu0 0.0
    %861 = vmatprep.mubr.f32.mxu0 0.0
    %862 = vmatmul.mubr.f32.gmra.mrb[0].mxu0 %v795
    %v863 = vpop.f32.mrb[0].mxu0
    %v864 = vadd.f32 0.0, %v863
    %v865 = vpop.f32.mrb[0].mxu0
    %866 = vdwg.mxu0
    %v867 = vadd.f32 %v794, %v864
    %v868 = vxor.u32 %v867, 2147483648
    %v869 = vmul.f32 %v868, 1.442695
    %v870 = vpow.pop %v869
    %v871 = vadd.f32 %v870, 1.0
    %v872 = vrcp.pop %v871
    %v873 = vmul.f32 1.0, %v872
    %v874 = vtanh.pop %v867
    %v875 = vmul.f32 %v873, %v780
    %877 = vrot.lane.b32.xlu0 %v874, 64
    %v878 = vpop.permute.xlu0 %877
    %v880 = vmul.f32 %v873, %v878
    %882 = vrot.lane.b32.xlu0 %v880, 32
    %v883 = vpop.permute.xlu0 %882
    %v885 = vadd.f32 %v875, %v883
    %v886 = vtanh.pop %v885
    %888 = vrot.lane.b32.xlu0 %v886, 64
    %v889 = vpop.permute.xlu0 %888
    %v891 = vmul.f32 %v873, %v889
    %893 = vrot.lane.b32.xlu0 %v891, 32
    %v894 = vpop.permute.xlu0 %893
    %s896 = scalar_lea.vmem [#allocation9], 14
    %897 = vst.msk [vmem:[%s896] sm:$0x3] %vm161, %v894
    %898 = vst.msk [vmem:[#allocation2] sm:$0x3] %vm161, %v894
    %900 = vrot.lane.b32.xlu0 %v885, 96
    %v901 = vpop.permute.xlu0 %900
    %903 = vst.msk [vmem:[#allocation3] sm:$0x3] %vm161, %v901
    // Predicated region
    $region22: #{tpu_custom_call.1} parent=1 // pred_check
      _
    $region23: #{tpu_custom_call.1} parent=1 // pred_check_branch
      %905 = sbr.rel (0) target = $region25
    $region24: #{tpu_custom_call.1} parent=1 // pred_region
      %s907 = ssub.s32 256, 256
      %908 = vsyncadd [#allocation6], %s907
      %s909 = sshll.u32 [#allocation9], 4
      %s910 = int_to_ptr.vmem [resolvable:$true] %s909
      %915 = dma.vmem_to_hbm [thread:$0]  %s910, 256, %s2, [#allocation6], 32, 32, 2
    $region25: #{tpu_custom_call.1} parent=1 // pred_fallthru
      _
    // Predicated region
    $region26: #{tpu_custom_call.1} parent=1 // pred_check
      _
    $region27: #{tpu_custom_call.1} parent=1 // pred_check_branch
      %917 = sbr.rel (0) target = $region29
    $region28: #{tpu_custom_call.1} parent=1 // pred_region
      %918 = dma.done [#allocation6], 256
    $region29: #{tpu_custom_call.1} parent=1 // pred_fallthru
      _
    %919 = vsyncpa [#allocation5], 1
    %920 = vsyncpa [#allocation8], 1
    %921 = vsyncpa [#allocation6], 1

</llo_original>
